<compile_context>
chip_gen: v6e
topology: v6e:2x2x1
jax: 0.10.0
libtpu: 0.0.40
codegen_flags: <defaults>
</compile_context>

<pallas_src>
import functools
import math

import jax
import jax.numpy as jnp
from jax.experimental import pallas as pl
from jax.experimental.pallas import tpu as pltpu


def _round_up(x, m):
    return (x + m - 1) // m * m


# ----------------------------------------------------------------------------
# Kernels
# ----------------------------------------------------------------------------
def _vsn_fused_kernel(x_ref, w_ref, b_ref, o_ref, *, n_vars, hidden,
                      approx_recip):
    """Fused variable-selection kernel.

    x_ref : (TN, S_tot)        concatenated features tile (bf16 or f32)
    w_ref : (S_tot, W_pad)     fused block-diagonal weight (+ logits columns)
    b_ref : (1, W_pad)         fused bias (f32)
    o_ref : (TN, H)            output tile
    """
    # One MXU push produces every per-variable transform AND the selection
    # logits for this row tile (f32 accumulation).
    y = jnp.dot(x_ref[...], w_ref[...],
                preferred_element_type=jnp.float32) + b_ref[...]

    lo = n_vars * hidden
    logits = y[:, lo:lo + n_vars]                       # (TN, n_vars)
    m = jnp.max(logits, axis=-1, keepdims=True)
    e = jnp.exp(logits - m)
    inv = pl.reciprocal(jnp.sum(e, axis=-1, keepdims=True), approx=approx_recip)
    sw = e * inv                                        # softmax weights

    # Weighted sum over variables; everything stays in registers (no scratch).
    out = y[:, 0:hidden] * sw[:, 0:1]
    for i in range(1, n_vars):
        out = out + y[:, i * hidden:(i + 1) * hidden] * sw[:, i:i + 1]
    o_ref[...] = out.astype(o_ref.dtype)


def _linear_kernel(x_ref, w_ref, b_ref, o_ref):
    """Single-variable fallback: out = x @ W^T + b (bias added in f32)."""
    o_ref[...] = (jnp.dot(x_ref[...], w_ref[...],
                          preferred_element_type=jnp.float32)
                  + b_ref[...]).astype(o_ref.dtype)


# ----------------------------------------------------------------------------
# Wrapper (fused-weight construction, padding, pallas_call setup)
# ----------------------------------------------------------------------------
def variable_selection_network(inputs, params, hidden_size, *, tile_n=256,
                               compute_dtype=jnp.bfloat16,
                               out_dtype=jnp.float32):
    """VariableSelectionNetwork forward. inputs[i]: (B, T, S_i) -> (B, T, H)."""
    n_vars = len(inputs)
    H = hidden_size
    B, T = inputs[0].shape[0], inputs[0].shape[1]
    N = B * T

    # Row tiling: large tiles amortize per-grid-step overhead; clamp to a
    # sublane-aligned N for tiny problems and pad rows when N % tile != 0.
    # Per-step VMEM footprint at tile=1024 is <1 MiB, so this fits the scoped
    # VMEM of every generation (v5e 16 MiB default raised below, v7x 64 MiB).
    tile = min(tile_n, _round_up(N, 8))
    n_pad = _round_up(N, tile)
    grid = (n_pad // tile,)

    ws, bs = params["ws"], params["bs"]              # (H, S_i) / (H,)
    approx_recip = compute_dtype != jnp.float32

    cparams = pltpu.CompilerParams(
        dimension_semantics=("parallel",),
        vmem_limit_bytes=32 * 1024 * 1024)

    if n_vars == 1:
        S = inputs[0].shape[-1]
        x = inputs[0].reshape(N, S)
        if n_pad != N:
            x = jnp.pad(x, ((0, n_pad - N), (0, 0)))
        x = x.astype(compute_dtype)
        w_t = ws[0].T.astype(compute_dtype)                   # (S, H)
        b = bs[0].astype(jnp.float32).reshape(1, H)
        out = pl.pallas_call(
            _linear_kernel,
            out_shape=jax.ShapeDtypeStruct((n_pad, H), out_dtype),
            grid=grid,
            in_specs=[
                pl.BlockSpec((tile, S), lambda i: (i, 0)),
                pl.BlockSpec((S, H), lambda i: (0, 0)),
                pl.BlockSpec((1, H), lambda i: (0, 0)),
            ],
            out_specs=pl.BlockSpec((tile, H), lambda i: (i, 0)),
            compiler_params=cparams,
        )(x, w_t, b)
        return out[:N].reshape(B, T, H)

    # ---- multi-variable path ------------------------------------------------
    wv = params["wv"].astype(jnp.float32)            # (n_vars, H)
    bv = params["bv"].astype(jnp.float32)            # (n_vars,)
    wv_t = wv.T                                      # (H, n_vars)

    S_list = [int(x.shape[-1]) for x in inputs]
    S_tot = sum(S_list)
    n_out = n_vars * H + n_vars
    n_out_pad = _round_up(n_out, 128)                # lane-dense matmul output

    # Single feature-concat (no stack+pad of every activation to S_max).
    x_cat = jnp.concatenate([x.reshape(N, -1) for x in inputs], axis=-1)
    if n_pad != N:
        x_cat = jnp.pad(x_cat, ((0, n_pad - N), (0, 0)))
    x_cat = x_cat.astype(compute_dtype)

    # Fused block-diagonal weight + extra logits columns (exact algebra).
    blocks = []
    for i, w in enumerate(ws):
        wt = w.astype(jnp.float32).T                 # (S_i, H)
        row = [wt if j == i else jnp.zeros((S_list[i], H), jnp.float32)
               for j in range(n_vars)]
        row.append((wt @ wv_t) / n_vars)             # (S_i, n_vars) logit cols
        blocks.append(jnp.concatenate(row, axis=1))
    w_fused = jnp.concatenate(blocks, axis=0)        # (S_tot, n_out)
    w_fused = jnp.pad(w_fused, ((0, 0), (0, n_out_pad - n_out)))
    w_fused = w_fused.astype(compute_dtype)

    b_parts = [b.astype(jnp.float32) for b in bs]
    b_logit = bv + (sum(b_parts) / n_vars) @ wv_t    # (n_vars,)
    b_fused = jnp.concatenate(b_parts + [b_logit])
    b_fused = jnp.pad(b_fused, (0, n_out_pad - n_out)).reshape(1, n_out_pad)

    kernel = functools.partial(_vsn_fused_kernel, n_vars=n_vars, hidden=H,
                               approx_recip=approx_recip)
    out = pl.pallas_call(
        kernel,
        out_shape=jax.ShapeDtypeStruct((n_pad, H), out_dtype),
        grid=grid,
        in_specs=[
            pl.BlockSpec((tile, S_tot), lambda i: (i, 0)),
            pl.BlockSpec((S_tot, n_out_pad), lambda i: (0, 0)),
            pl.BlockSpec((1, n_out_pad), lambda i: (0, 0)),
        ],
        out_specs=pl.BlockSpec((tile, H), lambda i: (i, 0)),
        compiler_params=cparams,
    )(x_cat, w_fused, b_fused)
    return out[:N].reshape(B, T, H)


# ----------------------------------------------------------------------------
# Deterministic parameter init (mimics nn.Linear default U(-1/sqrt(fan_in), .))
# ----------------------------------------------------------------------------
def init_params(key, input_sizes, hidden_size):
    n_vars = len(input_sizes)
    keys = jax.random.split(key, 2 * n_vars + 2)
    ws, bs = [], []
    for i, size in enumerate(input_sizes):
        k = 1.0 / math.sqrt(size)
        ws.append(jax.random.uniform(keys[2 * i], (hidden_size, size),
                                     minval=-k, maxval=k, dtype=jnp.float32))
        bs.append(jax.random.uniform(keys[2 * i + 1], (hidden_size,),
                                     minval=-k, maxval=k, dtype=jnp.float32))
    kv = 1.0 / math.sqrt(hidden_size)
    wv = jax.random.uniform(keys[-2], (n_vars, hidden_size),
                            minval=-kv, maxval=kv, dtype=jnp.float32)
    bv = jax.random.uniform(keys[-1], (n_vars,),
                            minval=-kv, maxval=kv, dtype=jnp.float32)
    return {"ws": ws, "bs": bs, "wv": wv, "bv": bv}


# Pure-JAX reference (matches the PyTorch module in eval mode).
def reference_vsn(inputs, params, hidden_size):
    ws, bs, wv, bv = params["ws"], params["bs"], params["wv"], params["bv"]
    if len(inputs) == 1:
        return inputs[0] @ ws[0].T + bs[0]
    t = [x @ w.T + b for x, w, b in zip(inputs, ws, bs)]
    t = jnp.stack(t, axis=-1)                        # (..., H, n)
    flat = t.mean(axis=-1)                           # (..., H)
    logits = flat @ wv.T + bv                        # (..., n)
    sw = jax.nn.softmax(logits, axis=-1)
    return jnp.sum(t * sw[..., None, :], axis=-1)    # (..., H)


if __name__ == "__main__":
    key = jax.random.PRNGKey(0)
    B, T, H = 2, 8, 32
    input_sizes = [4, 6, 8]

    pkey, *ikeys = jax.random.split(key, len(input_sizes) + 1)
    params = init_params(pkey, input_sizes, H)
    inputs = [jax.random.normal(k, (B, T, s), dtype=jnp.float32)
              for k, s in zip(ikeys, input_sizes)]

    ref = reference_vsn(inputs, params, H)

    # f32 streaming path (reference-parity check, exact divide in softmax).
    out_f32 = variable_selection_network(inputs, params, H,
                                         compute_dtype=jnp.float32)
    out_f32 = jax.block_until_ready(out_f32)
    assert out_f32.shape == (B, T, H)
    assert jnp.allclose(out_f32, ref, atol=1e-4, rtol=1e-4), "f32 mismatch"

    # Default bf16 streaming path (f32 accumulation, approx reciprocal).
    out_bf16 = variable_selection_network(inputs, params, H)
    out_bf16 = jax.block_until_ready(out_bf16)
    assert out_bf16.shape == (B, T, H)
    assert jnp.allclose(out_bf16, ref, atol=2e-2, rtol=2e-2), "bf16 mismatch"

    # Single-variable path (as used inside TemporalVariableSelection).
    sv_params = init_params(jax.random.PRNGKey(1), [H], H)
    sv_inputs = [jax.random.normal(jax.random.PRNGKey(2), (B, T, H),
                                   dtype=jnp.float32)]
    sv_out = variable_selection_network(sv_inputs, sv_params, H,
                                        compute_dtype=jnp.float32)
    sv_out = jax.block_until_ready(sv_out)
    sv_ref = reference_vsn(sv_inputs, sv_params, H)
    assert jnp.allclose(sv_out, sv_ref, atol=1e-4, rtol=1e-4), "single-var mismatch"

    print("KERNEL_OK")
</pallas_src>

<mosaic_0001>
module attributes {stable_mosaic.version = 11 : i64} {
  func.func @_vsn_fused_kernel(%arg0: i32, %arg1: memref<16x18xf32, #tpu.memory_space<vmem>>, %arg2: memref<18x128xf32, #tpu.memory_space<vmem>>, %arg3: memref<1x128xf32, #tpu.memory_space<vmem>>, %arg4: memref<16x32xf32, #tpu.memory_space<vmem>>) attributes {dimension_semantics = [#tpu.dimension_semantics<parallel>], iteration_bounds = array<i64: 1>, scalar_prefetch = 0 : i64, scratch_operands = 0 : i64, tpu.core_type = #tpu.core_type<tc>, window_params = [{transform_indices = @transform_0, window_bounds = array<i64: 16, 18>}, {pipeline_mode = #tpu.pipeline_mode<synchronous>, transform_indices = @transform_1, window_bounds = array<i64: 18, 128>}, {pipeline_mode = #tpu.pipeline_mode<synchronous>, transform_indices = @transform_2, window_bounds = array<i64: 1, 128>}, {transform_indices = @transform_3, window_bounds = array<i64: 16, 32>}]} {
    %c0 = arith.constant 0 : index
    %c0_0 = arith.constant 0 : index
    %0 = vector.load %arg1[%c0, %c0_0] : memref<16x18xf32, #tpu.memory_space<vmem>>, vector<16x18xf32>
    %c0_1 = arith.constant 0 : index
    %c0_2 = arith.constant 0 : index
    %1 = vector.load %arg2[%c0_1, %c0_2] : memref<18x128xf32, #tpu.memory_space<vmem>>, vector<18x128xf32>
    %cst = arith.constant dense<0.000000e+00> : vector<16x128xf32>
    %2 = tpu.matmul %0, %1, %cst {dimension_numbers = #tpu.dot_dimension_numbers<[1], [0], [0], [1], [0, 0, 1, 1], [], []>} : vector<16x18xf32>, vector<18x128xf32>, vector<16x128xf32> -> vector<16x128xf32>
    %c0_3 = arith.constant 0 : index
    %c0_4 = arith.constant 0 : index
    %3 = vector.load %arg3[%c0_3, %c0_4] : memref<1x128xf32, #tpu.memory_space<vmem>>, vector<1x128xf32>
    %4 = vector.broadcast %3 : vector<1x128xf32> to vector<16x128xf32>
    %5 = arith.addf %2, %4 : vector<16x128xf32>
    %6 = vector.extract_strided_slice %5 {offsets = [0, 96], sizes = [16, 3], strides = [1, 1]} : vector<16x128xf32> to vector<16x3xf32>
    %cst_5 = arith.constant dense<0xFF800000> : vector<16xf32>
    %7 = vector.multi_reduction <maximumf>, %6, %cst_5 [1] : vector<16x3xf32> to vector<16xf32>
    %8 = vector.shape_cast %7 : vector<16xf32> to vector<16x1xf32>
    %9 = vector.broadcast %8 : vector<16x1xf32> to vector<16x3xf32>
    %10 = arith.subf %6, %9 : vector<16x3xf32>
    %11 = math.exp %10 : vector<16x3xf32>
    %cst_6 = arith.constant dense<0.000000e+00> : vector<16xf32>
    %12 = vector.multi_reduction <add>, %11, %cst_6 [1] : vector<16x3xf32> to vector<16xf32>
    %13 = vector.shape_cast %12 : vector<16xf32> to vector<16x1xf32>
    %14 = tpu.reciprocal %13 : vector<16x1xf32> -> vector<16x1xf32>
    %15 = vector.broadcast %14 : vector<16x1xf32> to vector<16x3xf32>
    %16 = arith.mulf %11, %15 : vector<16x3xf32>
    %17 = vector.extract_strided_slice %5 {offsets = [0, 0], sizes = [16, 32], strides = [1, 1]} : vector<16x128xf32> to vector<16x32xf32>
    %18 = vector.extract_strided_slice %16 {offsets = [0, 0], sizes = [16, 1], strides = [1, 1]} : vector<16x3xf32> to vector<16x1xf32>
    %19 = vector.broadcast %18 : vector<16x1xf32> to vector<16x32xf32>
    %20 = arith.mulf %17, %19 : vector<16x32xf32>
    %21 = vector.extract_strided_slice %5 {offsets = [0, 32], sizes = [16, 32], strides = [1, 1]} : vector<16x128xf32> to vector<16x32xf32>
    %22 = vector.extract_strided_slice %16 {offsets = [0, 1], sizes = [16, 1], strides = [1, 1]} : vector<16x3xf32> to vector<16x1xf32>
    %23 = vector.broadcast %22 : vector<16x1xf32> to vector<16x32xf32>
    %24 = arith.mulf %21, %23 : vector<16x32xf32>
    %25 = arith.addf %20, %24 : vector<16x32xf32>
    %26 = vector.extract_strided_slice %5 {offsets = [0, 64], sizes = [16, 32], strides = [1, 1]} : vector<16x128xf32> to vector<16x32xf32>
    %27 = vector.extract_strided_slice %16 {offsets = [0, 2], sizes = [16, 1], strides = [1, 1]} : vector<16x3xf32> to vector<16x1xf32>
    %28 = vector.broadcast %27 : vector<16x1xf32> to vector<16x32xf32>
    %29 = arith.mulf %26, %28 : vector<16x32xf32>
    %30 = arith.addf %25, %29 : vector<16x32xf32>
    %c0_7 = arith.constant 0 : index
    %c0_8 = arith.constant 0 : index
    %31 = vector.load %arg4[%c0_7, %c0_8] : memref<16x32xf32, #tpu.memory_space<vmem>>, vector<16x32xf32>
    tpu.vector_store %arg4[%c0_7, %c0_8], %30 {strides = array<i32>} : memref<16x32xf32, #tpu.memory_space<vmem>>, vector<16x32xf32>,
    return
  }
  func.func @transform_0(%arg0: i32) -> (i32, i32) {
    %c0_i32 = arith.constant 0 : i32
    %c0_i32_0 = arith.constant 0 : i32
    return %arg0, %c0_i32 : i32, i32
  }
  func.func @transform_1(%arg0: i32) -> (i32, i32) {
    %c0_i32 = arith.constant 0 : i32
    %c0_i32_0 = arith.constant 0 : i32
    %c0_i32_1 = arith.constant 0 : i32
    return %c0_i32, %c0_i32_0 : i32, i32
  }
  func.func @transform_2(%arg0: i32) -> (i32, i32) {
    %c0_i32 = arith.constant 0 : i32
    %c0_i32_0 = arith.constant 0 : i32
    %c0_i32_1 = arith.constant 0 : i32
    return %c0_i32, %c0_i32_0 : i32, i32
  }
  func.func @transform_3(%arg0: i32) -> (i32, i32) {
    %c0_i32 = arith.constant 0 : i32
    %c0_i32_0 = arith.constant 0 : i32
    return %arg0, %c0_i32 : i32, i32
  }
}

</mosaic_0001>

<llo_original>
// kernel: tpu_custom_call.1
$region0: #{tpu_custom_call.1}
  #allocation0 [shape = 'u32[]', space=smem, size = 0x4, offset = 0x4, fixed_abs, tag = 'smem constant byte address 0x4 - core index']
  #allocation1 [shape = 'u32[144,128]{1,0:T(1,128)}', space=vmem, size = 0x12000, scoped, tag = 'internal scratch']
  %s0 = inlined_call_operand.hbm [shape: f32[16,18], index: 0, kind: input, shape index: {}]
  %s1 = inlined_call_operand.hbm [shape: f32[18,128], index: 1, kind: input, shape index: {}]
  %s2 = inlined_call_operand.vmem [shape: f32[1,128], index: 2, kind: input, shape index: {}]
  %s3 = inlined_call_operand.hbm [shape: f32[16,32], index: 3, kind: output, shape index: {}]
  %s4 = sld [smem:[#allocation0]]
  $region30: #{tpu_custom_call.1} parent=0
    _
  %s6 = ssub.s32 1, %s4
  %s7 = scalar_select 0, %s6, %s4
  $region1: #{tpu_custom_call.1} parent=0
    #allocation2 [shape = 'u8[8192]{0}', space=vmem, size = 0x2000, scoped, tag = 'input window, operand 0, single buffered']
    #allocation3 [shape = 's32[1]{0}', space=sflag, size = 0x4, scoped, tag = 'scoped memory for tpu_custom_call.1']
    #allocation4 [shape = 's32[1]{0}', space=sflag, size = 0x4, scoped, tag = 'scoped memory for tpu_custom_call.1']
    #allocation5 [shape = 'u8[12288]{0}', space=vmem, size = 0x3000, scoped, tag = 'input window, operand 1, single buffered']
    #allocation6 [shape = 's32[1]{0}', space=sflag, size = 0x4, scoped, tag = 'scoped memory for tpu_custom_call.1']
    #allocation7 [shape = 'u8[8192]{0}', space=vmem, size = 0x2000, scoped, tag = 'output window, operand 0, single buffered']
    %8 = vsyncpa [#allocation3], 0
    %9 = vsyncpa [#allocation6], 0
    %10 = vsyncpa [#allocation4], 0
    // Predicated region
    $region2: #{tpu_custom_call.1} parent=1 // pred_check
      _
    $region3: #{tpu_custom_call.1} parent=1 // pred_check_branch
      %12 = sbr.rel (0) target = $region5
    $region4: #{tpu_custom_call.1} parent=1 // pred_region
      %s14 = ssub.s32 256, 256
      %15 = vsyncadd [#allocation3], %s14
      %s16 = sshll.u32 [#allocation2], 4
      %s17 = int_to_ptr.vmem [resolvable:$true] %s16
      %22 = dma.hbm_to_vmem [thread:$0]  %s0, 256, %s17, [#allocation3], 128, 128, 8
    $region5: #{tpu_custom_call.1} parent=1 // pred_fallthru
      _
    // Predicated region
    $region6: #{tpu_custom_call.1} parent=1 // pred_check
      _
    $region7: #{tpu_custom_call.1} parent=1 // pred_check_branch
      %24 = sbr.rel (0) target = $region9
    $region8: #{tpu_custom_call.1} parent=1 // pred_region
      %s26 = ssub.s32 384, 384
      %27 = vsyncadd [#allocation6], %s26
      %s28 = sshll.u32 [#allocation5], 4
      %s29 = int_to_ptr.vmem [resolvable:$true] %s28
      %34 = dma.hbm_to_vmem [thread:$0]  %s1, 384, %s29, [#allocation6], 128, 128, 8
    $region9: #{tpu_custom_call.1} parent=1 // pred_fallthru
      _
    // Predicated region
    $region10: #{tpu_custom_call.1} parent=1 // pred_check
      _
    $region11: #{tpu_custom_call.1} parent=1 // pred_check_branch
      %36 = sbr.rel (0) target = $region13
    $region12: #{tpu_custom_call.1} parent=1 // pred_region
      _
    $region13: #{tpu_custom_call.1} parent=1 // pred_fallthru
      _
    // Predicated region
    $region14: #{tpu_custom_call.1} parent=1 // pred_check
      _
    $region15: #{tpu_custom_call.1} parent=1 // pred_check_branch
      %38 = sbr.rel (0) target = $region17
    $region16: #{tpu_custom_call.1} parent=1 // pred_region
      %39 = dma.done [#allocation3], 256
    $region17: #{tpu_custom_call.1} parent=1 // pred_fallthru
      _
    // Predicated region
    $region18: #{tpu_custom_call.1} parent=1 // pred_check
      _
    $region19: #{tpu_custom_call.1} parent=1 // pred_check_branch
      %41 = sbr.rel (0) target = $region21
    $region20: #{tpu_custom_call.1} parent=1 // pred_region
      %42 = dma.done [#allocation6], 384
    $region21: #{tpu_custom_call.1} parent=1 // pred_fallthru
      _
    %v43 = vld [vmem:[#allocation2] sm:$0xff]
    %v44 = vld [vmem:[#allocation2 + $0x8] sm:$0xff]
    %v45 = vld [vmem:[#allocation5] sm:$0xff]
    %v46 = vld [vmem:[#allocation5 + $0x8] sm:$0xff]
    %v47 = vld [vmem:[#allocation5 + $0x10] sm:$0x3]
    %v48 = vld [vmem:[%s2] sm:$0x1]
    %v50 = vlaneseq
    %v51 = vshrl.u32 %v50, 7
    %v52 = vsub.s32 0, %v51
    %v53 = vrot.slane %v48, %v52
    %vm55 = vcmask 146432
    %v57 = vsel %vm55, %v43, 0
    %v60 = vsel %vm55, %v44, 0
    %vm62 = vcmask 1041408
    %v64 = vsel %vm62, %v47, 0
    %66 = vmatprep.subr.mxu0 0.0
    %67 = vmatpush1.msra.mxu0 0.0
    %68 = vmatprep.subr.mxu0 0.0
    %69 = vmatpush1.msra.mxu0 0.0
    %70 = vmatprep.subr.mxu0 0.0
    %71 = vmatpush1.msra.mxu0 0.0
    %72 = vmatprep.subr.mxu0 0.0
    %73 = vmatpush1.msra.mxu0 0.0
    %74 = vmatprep.subr.mxu0 0.0
    %75 = vmatpush1.msra.mxu0 0.0
    %76 = vmatprep.subr.mxu0 0.0
    %77 = vmatpush1.msra.mxu0 0.0
    %78 = vmatprep.subr.mxu0 0.0
    %79 = vmatpush1.msra.mxu0 0.0
    %80 = vmatprep.subr.mxu0 0.0
    %81 = vmatpush1.msra.mxu0 0.0
    %82 = vmatprep.subr.mxu0 0.0
    %83 = vmatpush1.msra.mxu0 0.0
    %84 = vmatprep.subr.mxu0 0.0
    %85 = vmatpush1.msra.mxu0 0.0
    %86 = vmatprep.subr.mxu0 0.0
    %87 = vmatpush1.msra.mxu0 0.0
    %88 = vmatprep.subr.mxu0 0.0
    %89 = vmatpush1.msra.mxu0 0.0
    %90 = vmatprep.subr.mxu0 0.0
    %91 = vmatpush1.msra.mxu0 0.0
    %92 = vmatprep.subr.mxu0 0.0
    %93 = vmatpush1.msra.mxu0 %v64
    %94 = vmatprep.subr.mxu0 0.0
    %95 = vmatpush1.msra.mxu0 %v46
    %96 = vmatprep.subr.mxu0 0.0
    %97 = vmatpush1.msra.mxu0 %v45
    %98 = vmatprep.subr.mxu0 0.0
    %99 = vmatpush2.msra.mxu0 0.0
    %100 = vmatprep.subr.mxu0 0.0
    %101 = vmatpush2.msra.mxu0 0.0
    %102 = vmatprep.subr.mxu0 0.0
    %103 = vmatpush2.msra.mxu0 0.0
    %104 = vmatprep.subr.mxu0 0.0
    %105 = vmatpush2.msra.mxu0 0.0
    %106 = vmatprep.subr.mxu0 0.0
    %107 = vmatpush2.msra.mxu0 0.0
    %108 = vmatprep.subr.mxu0 0.0
    %109 = vmatpush2.msra.mxu0 0.0
    %110 = vmatprep.subr.mxu0 0.0
    %111 = vmatpush2.msra.mxu0 0.0
    %112 = vmatprep.subr.mxu0 0.0
    %113 = vmatpush2.msra.mxu0 0.0
    %114 = vmatprep.subr.mxu0 0.0
    %115 = vmatpush2.msra.mxu0 0.0
    %116 = vmatprep.subr.mxu0 0.0
    %117 = vmatpush2.msra.mxu0 0.0
    %118 = vmatprep.subr.mxu0 0.0
    %119 = vmatpush2.msra.mxu0 0.0
    %120 = vmatprep.subr.mxu0 0.0
    %121 = vmatpush2.msra.mxu0 0.0
    %122 = vmatprep.subr.mxu0 0.0
    %123 = vmatpush2.msra.mxu0 0.0
    %124 = vmatprep.subr.mxu0 0.0
    %125 = vmatpush2.msra.mxu0 0.0
    %126 = vmatprep.subr.mxu0 0.0
    %127 = vmatpush2.msra.mxu0 0.0
    %128 = vmatprep.subr.mxu0 0.0
    %129 = vmatpush2.msra.mxu0 0.0
    %130 = vmatprep.mubr.f32.mxu0 0.0
    %131 = vmatmul.mubr.f32.gmra.mxu0 %v57
    %v132 = vpop.f32.mrf.mxu0
    %v133 = vadd.f32 %v53, %v132
    %v134 = vpop.f32.mrf.mxu0
    %135 = vmatprep.mubr.f32.mxu0 0.0
    %136 = vmatmul.mubr.f32.gmra.mxu0 %v60
    %v137 = vpop.f32.mrf.mxu0
    %v138 = vadd.f32 %v53, %v137
    %v139 = vpop.f32.mrf.mxu0
    %140 = vdwg.mxu0
    %vm141 = vcmask 810752
    %v142 = vsel %vm141, %v133, -inf
    %143 = vmax.xlane.f32.xlu0 %v142
    %v144 = vpop.xlane.xlu0 %143
    %v145 = vsel %vm141, %v138, -inf
    %146 = vmax.xlane.f32.xlu0 %v145
    %v147 = vpop.xlane.xlu0 %146
    %v148 = vsub.f32 %v133, %v144
    %v149 = vsub.f32 %v138, %v147
    %v150 = vmul.f32 %v148, 1.442695
    %v151 = vpow.pop %v150
    %v152 = vmul.f32 %v149, 1.442695
    %v153 = vpow.pop %v152
    %156 = vrot.lane.b32.xlu0 %v151, 32
    %v157 = vpop.permute.xlu0 %156
    %158 = vrot.lane.b32.xlu0 %v153, 32
    %v159 = vpop.permute.xlu0 %158
    %vm162 = vcmask 23552
    %v163 = vsel %vm162, %v157, 0.0
    %164 = vadd.xlane.f32.xlu0 %v163
    %v165 = vpop.xlane.xlu0 %164
    %v166 = vsel %vm162, %v159, 0.0
    %167 = vadd.xlane.f32.xlu0 %v166
    %v168 = vpop.xlane.xlu0 %167
    %v169 = vrcp.pop %v165
    %v170 = vrcp.pop %v168
    %v171 = vmul.f32 %v151, %v169
    %v172 = vmul.f32 %v153, %v170
    %174 = vset.pattern.permute.xlu0 96
    %175 = vperm.xlu0 %174, %v171
    %v176 = vpop.permute.xlu0 %175
    %179 = vset.pattern.permute.xlu0 96
    %180 = vperm.xlu0 %179, %v172
    %v181 = vpop.permute.xlu0 %180
    %v183 = vmul.f32 %v133, %v176
    %v184 = vmul.f32 %v138, %v181
    %185 = vset.pattern.permute.xlu0 97
    %186 = vperm.xlu0 %185, %v171
    %v187 = vpop.permute.xlu0 %186
    %189 = vset.pattern.permute.xlu0 97
    %190 = vperm.xlu0 %189, %v172
    %v191 = vpop.permute.xlu0 %190
    %v193 = vmul.f32 %v133, %v187
    %v194 = vmul.f32 %v138, %v191
    %197 = vrot.lane.b32.xlu0 %v193, 96
    %v198 = vpop.permute.xlu0 %197
    %199 = vrot.lane.b32.xlu0 %v194, 96
    %v200 = vpop.permute.xlu0 %199
    %v203 = vadd.f32 %v183, %v198
    %v204 = vadd.f32 %v184, %v200
    %205 = vset.pattern.permute.xlu0 98
    %206 = vperm.xlu0 %205, %v171
    %v207 = vpop.permute.xlu0 %206
    %209 = vset.pattern.permute.xlu0 98
    %210 = vperm.xlu0 %209, %v172
    %v211 = vpop.permute.xlu0 %210
    %v213 = vmul.f32 %v133, %v207
    %v214 = vmul.f32 %v138, %v211
    %217 = vrot.lane.b32.xlu0 %v213, 64
    %v218 = vpop.permute.xlu0 %217
    %219 = vrot.lane.b32.xlu0 %v214, 64
    %v220 = vpop.permute.xlu0 %219
    %v223 = vadd.f32 %v203, %v218
    %v224 = vadd.f32 %v204, %v220
    %vm225 = vcmask 261120
    %226 = vst.msk [vmem:[#allocation7] sm:$0xff] %vm225, %v223
    %227 = vst.msk [vmem:[#allocation7 + $0x8] sm:$0xff] %vm225, %v224
    // Predicated region
    $region22: #{tpu_custom_call.1} parent=1 // pred_check
      _
    $region23: #{tpu_custom_call.1} parent=1 // pred_check_branch
      %229 = sbr.rel (0) target = $region25
    $region24: #{tpu_custom_call.1} parent=1 // pred_region
      %s231 = ssub.s32 256, 256
      %232 = vsyncadd [#allocation4], %s231
      %s233 = sshll.u32 [#allocation7], 4
      %s234 = int_to_ptr.vmem [resolvable:$true] %s233
      %239 = dma.vmem_to_hbm [thread:$0]  %s234, 256, %s3, [#allocation4], 128, 128, 8
    $region25: #{tpu_custom_call.1} parent=1 // pred_fallthru
      _
    // Predicated region
    $region26: #{tpu_custom_call.1} parent=1 // pred_check
      _
    $region27: #{tpu_custom_call.1} parent=1 // pred_check_branch
      %241 = sbr.rel (0) target = $region29
    $region28: #{tpu_custom_call.1} parent=1 // pred_region
      %242 = dma.done [#allocation4], 256
    $region29: #{tpu_custom_call.1} parent=1 // pred_fallthru
      _
    %243 = vsyncpa [#allocation3], 1
    %244 = vsyncpa [#allocation6], 1
    %245 = vsyncpa [#allocation4], 1

</llo_original>
